<compile_context>
chip_gen: v5e
topology: v5e:2x2
jax: 0.10.0
libtpu: 0.0.40
codegen_flags: <defaults>
</compile_context>

<pallas_src>
import math
import jax
import jax.numpy as jnp
from jax.experimental import pallas as pl
from jax.experimental.pallas import tpu as pltpu

# ---- problem sizes (small, consistent with the module) ----
B = 2          # batch
N = 8          # set size (sequence length)
D = 32         # in_features == out_features == embed_dim == kdim == vdim
H = 4          # num_heads
DH = D // H    # head dim
G = B * H      # flattened (batch, head) axis used inside the kernel
EPS = 1e-5     # nn.LayerNorm default eps


def _layernorm(v, g, b):
    mu = jnp.mean(v, axis=-1, keepdims=True)
    var = jnp.mean((v - mu) ** 2, axis=-1, keepdims=True)
    return (v - mu) * jax.lax.rsqrt(var + EPS) * g + b


def sab_kernel(x_ref, wqk_ref, bq_ref, m_ref, wff_ref, bmisc_ref, o_ref):
    # bmisc rows: 0 bo_total, 1 bff, 2 ln1_gamma, 3 ln1_beta, 4 ln2_gamma, 5 ln2_beta
    x3 = x_ref[...]                       # (B, N, D)
    x2 = x3.reshape(B * N, D)             # (B*N, D) — trailing dims kept, layout no-op

    # Broadcast x across heads: xg[g] = x3[g // H], g = b*H + h.
    # Pure major-axis replication + leading-dim merge -> no lane/sublane shuffles.
    xg = jnp.broadcast_to(x3[:, None, :, :], (B, H, N, D)).reshape(G, N, D)

    # --- scores --------------------------------------------------------------
    # Q carries the folded (Wq@Wiq)*scale and its bias; K needs no bias (a bias
    # on K adds a constant along the softmax axis, which softmax cancels).
    Qg = jnp.einsum("gnd,gdk->gnk", xg, wqk_ref[0],
                    preferred_element_type=jnp.float32) + bq_ref[...]       # (G, N, DH)
    Kg = jnp.einsum("gnd,gdk->gnk", xg, wqk_ref[1],
                    preferred_element_type=jnp.float32)                     # (G, N, DH)

    s = jnp.einsum("gnk,gmk->gnm", Qg, Kg,
                   preferred_element_type=jnp.float32)                      # (G, N, N)
    s = s - jnp.max(s, axis=-1, keepdims=True)
    p = jnp.exp(s)
    p = p * pl.reciprocal(jnp.sum(p, axis=-1, keepdims=True), approx=True)

    # --- value path ----------------------------------------------------------
    # m_ref[g] = Wv_h @ Wo_h (D x D): the V projection and the out-projection in
    # one matmul per head — no DH-wide lane tiles, no head concat.  The V-bias
    # pushed through Wo is a constant and lives in bmisc[0].
    xm = jnp.einsum("gnd,gde->gne", xg, m_ref[...],
                    preferred_element_type=jnp.float32)                     # (G, N, D)
    attg = jnp.einsum("gnm,gme->gne", p, xm,
                      preferred_element_type=jnp.float32)                   # (G, N, D)
    att = attg.reshape(B, H, N, D).sum(axis=1).reshape(B * N, D) + bmisc_ref[0]

    # h = ln1(x + att)
    hdd = _layernorm(x2 + att, bmisc_ref[2], bmisc_ref[3])

    # ff = relu(h @ Wff + bff)   (dropout = 0.0 -> no-op)
    ff = jnp.maximum(
        jnp.dot(hdd, wff_ref[...], preferred_element_type=jnp.float32) + bmisc_ref[1],
        0.0,
    )

    # out = ln2(h + ff)
    o_ref[...] = _layernorm(hdd + ff, bmisc_ref[4], bmisc_ref[5]).reshape(B, N, D)


@jax.jit
def sab_forward(x, wqk_g, bq_g, m_g, wff, bmisc):
    return pl.pallas_call(
        sab_kernel,
        out_shape=jax.ShapeDtypeStruct((B, N, D), jnp.float32),
        in_specs=[pl.BlockSpec(memory_space=pltpu.MemorySpace.VMEM)] * 6,
        out_specs=pl.BlockSpec(memory_space=pltpu.MemorySpace.VMEM),
    )(x, wqk_g, bq_g, m_g, wff, bmisc)


# --------------------------------------------------------------------------
# Host-side parameter handling
#
# Raw parameterization (mirrors the PyTorch module):
#   w_stack (8, D, D): 0 Wq 1 Wk 2 Wv | 3 Wiq 4 Wik 5 Wiv | 6 Wo | 7 Wff  (stored (in, out))
#   b_stack (12, D):   0 bq 1 bk 2 bv 3 biq 4 bik 5 biv 6 bo 7 bff 8 ln1_g 9 ln1_b 10 ln2_g 11 ln2_b
# --------------------------------------------------------------------------
def make_params():
    key = jax.random.PRNGKey(0)
    kw, kb = jax.random.split(key)
    w_stack = 0.1 * jax.random.normal(kw, (8, D, D), dtype=jnp.float32)
    small_b = 0.05 * jax.random.normal(kb, (8, D), dtype=jnp.float32)
    ln_gamma = jnp.ones((2, D), dtype=jnp.float32)
    ln_beta = jnp.zeros((2, D), dtype=jnp.float32)
    b_stack = jnp.concatenate(
        [small_b, ln_gamma[0:1], ln_beta[0:1], ln_gamma[1:2], ln_beta[1:2]], axis=0
    )
    return w_stack, b_stack


def fold_kernel_params(w, b):
    """Exact algebraic fold of both projection stages, the score scale, the
    V->out-proj chain and its bias, expanded into per-(batch, head) slices so
    the kernel needs no lane slicing, head concat or transpose."""
    scale = 1.0 / math.sqrt(DH)
    wq_f = (w[0] @ w[3]) * scale
    bq_f = (b[0] @ w[3] + b[3]) * scale
    wk_f = w[1] @ w[4]                       # K bias dropped: cancels in softmax
    wv_f = w[2] @ w[5]
    bv_f = b[2] @ w[5] + b[5]

    def heads_of(wf):                        # (D, D) -> (H, D, DH)
        return wf.reshape(D, H, DH).transpose(1, 0, 2)

    wq_h = heads_of(wq_f)
    wk_h = heads_of(wk_f)
    wv_h = heads_of(wv_f)
    wo_h = w[6].reshape(H, DH, D)            # (H, DH, D)
    m_h = jnp.einsum("hdk,hke->hde", wv_h, wo_h)     # (H, D, D): Wv_h @ Wo_h

    # Replicate across the batch: g = b*H + h -> head (g % H).
    wqk_g = jnp.stack([jnp.tile(wq_h, (B, 1, 1)),
                       jnp.tile(wk_h, (B, 1, 1))])   # (2, G, D, DH)
    bq_g = jnp.tile(bq_f.reshape(H, DH), (B, 1))[:, None, :]   # (G, 1, DH)
    m_g = jnp.tile(m_h, (B, 1, 1))                              # (G, D, D)

    # V bias pushed through the out-projection is an additive constant
    # (softmax rows sum to 1): fold into the out-proj bias.
    bo_total = bv_f @ w[6] + b[6]
    wff = w[7]
    bmisc = jnp.stack([bo_total, b[7], b[8], b[9], b[10], b[11]])   # (6, D)
    return wqk_g, bq_g, m_g, wff, bmisc


def sab_reference(x, w, b):
    """Pure-JAX reference (same math as the PyTorch module, unfused)."""
    def ln(v, g, beta):
        mu = v.mean(-1, keepdims=True)
        var = ((v - mu) ** 2).mean(-1, keepdims=True)
        return (v - mu) / jnp.sqrt(var + EPS) * g + beta

    q = x @ w[0] + b[0]
    k = x @ w[1] + b[1]
    v_ = x @ w[2] + b[2]
    Q = q @ w[3] + b[3]
    K = k @ w[4] + b[4]
    V = v_ @ w[5] + b[5]
    Qh = Q.reshape(B, N, H, DH).transpose(0, 2, 1, 3)
    Kh = K.reshape(B, N, H, DH).transpose(0, 2, 1, 3)
    Vh = V.reshape(B, N, H, DH).transpose(0, 2, 1, 3)
    s = jnp.einsum("bhnd,bhmd->bhnm", Qh, Kh) / math.sqrt(DH)
    p = jax.nn.softmax(s, axis=-1)
    a = jnp.einsum("bhnm,bhmd->bhnd", p, Vh).transpose(0, 2, 1, 3).reshape(B, N, D)
    a = a @ w[6] + b[6]
    h = ln(x + a, b[8], b[9])
    ff = jax.nn.relu(h @ w[7] + b[7])
    return ln(h + ff, b[10], b[11])


if __name__ == "__main__":
    key = jax.random.PRNGKey(0)
    x = jax.random.normal(key, (B, N, D), dtype=jnp.float32)
    w_stack, b_stack = make_params()
    kparams = fold_kernel_params(w_stack, b_stack)

    out = sab_forward(x, *kparams)
    out = jax.block_until_ready(out)

    ref = sab_reference(x, w_stack, b_stack)
    assert out.shape == (B, N, D)
    # Tolerance covers fp32 rounding from the exact weight folds + the EUP
    # approximate reciprocal in the softmax normalization.
    err = float(jnp.max(jnp.abs(out - ref)))
    assert err < 1e-3, f"mismatch vs pure-JAX reference (max abs err {err})"

    print("KERNEL_OK")
</pallas_src>

<mosaic_0001>
module attributes {stable_mosaic.version = 11 : i64} {
  func.func @sab_kernel(%arg0: memref<2x8x32xf32, #tpu.memory_space<vmem>>, %arg1: memref<2x8x32x8xf32, #tpu.memory_space<vmem>>, %arg2: memref<8x1x8xf32, #tpu.memory_space<vmem>>, %arg3: memref<8x32x32xf32, #tpu.memory_space<vmem>>, %arg4: memref<32x32xf32, #tpu.memory_space<vmem>>, %arg5: memref<6x32xf32, #tpu.memory_space<vmem>>, %arg6: memref<2x8x32xf32, #tpu.memory_space<vmem>>) attributes {dimension_semantics = [], scalar_prefetch = 0 : i64, scratch_operands = 0 : i64, tpu.core_type = #tpu.core_type<tc>} {
    %c0 = arith.constant 0 : index
    %c0_0 = arith.constant 0 : index
    %c0_1 = arith.constant 0 : index
    %0 = vector.load %arg0[%c0, %c0_0, %c0_1] : memref<2x8x32xf32, #tpu.memory_space<vmem>>, vector<2x8x32xf32>
    %1 = vector.shape_cast %0 : vector<2x8x32xf32> to vector<16x32xf32>
    %2 = vector.shape_cast %0 : vector<2x8x32xf32> to vector<2x1x8x32xf32>
    %3 = vector.shape_cast %2 : vector<2x1x8x32xf32> to vector<2x1x8x32xf32>
    %4 = vector.broadcast %3 : vector<2x1x8x32xf32> to vector<2x4x8x32xf32>
    %5 = vector.shape_cast %4 : vector<2x4x8x32xf32> to vector<8x8x32xf32>
    %c0_2 = arith.constant 0 : index
    %c0_3 = arith.constant 0 : index
    %c0_4 = arith.constant 0 : index
    %c0_5 = arith.constant 0 : index
    %6 = vector.load %arg1[%c0_2, %c0_3, %c0_4, %c0_5] : memref<2x8x32x8xf32, #tpu.memory_space<vmem>>, vector<1x8x32x8xf32>
    %7 = vector.shape_cast %6 : vector<1x8x32x8xf32> to vector<8x32x8xf32>
    "tpu.trace_start"() <{level = 10 : i32, message = "gnd,gdk->gnk"}> : () -> ()
    %cst = arith.constant dense<0.000000e+00> : vector<8x8x8xf32>
    %8 = tpu.matmul %5, %7, %cst {dimension_numbers = #tpu.dot_dimension_numbers<[2], [1], [1], [2], [0, 0, 0, 1, 1, 2], [0], [0]>} : vector<8x8x32xf32>, vector<8x32x8xf32>, vector<8x8x8xf32> -> vector<8x8x8xf32>
    "tpu.trace_stop"() : () -> ()
    %c0_6 = arith.constant 0 : index
    %c0_7 = arith.constant 0 : index
    %c0_8 = arith.constant 0 : index
    %9 = vector.load %arg2[%c0_6, %c0_7, %c0_8] : memref<8x1x8xf32, #tpu.memory_space<vmem>>, vector<8x1x8xf32>
    %10 = vector.broadcast %9 : vector<8x1x8xf32> to vector<8x8x8xf32>
    %11 = arith.addf %8, %10 : vector<8x8x8xf32>
    %c1 = arith.constant 1 : index
    %c0_9 = arith.constant 0 : index
    %c0_10 = arith.constant 0 : index
    %c0_11 = arith.constant 0 : index
    %12 = vector.load %arg1[%c1, %c0_9, %c0_10, %c0_11] : memref<2x8x32x8xf32, #tpu.memory_space<vmem>>, vector<1x8x32x8xf32>
    %13 = vector.shape_cast %12 : vector<1x8x32x8xf32> to vector<8x32x8xf32>
    "tpu.trace_start"() <{level = 10 : i32, message = "gnd,gdk->gnk"}> : () -> ()
    %cst_12 = arith.constant dense<0.000000e+00> : vector<8x8x8xf32>
    %14 = tpu.matmul %5, %13, %cst_12 {dimension_numbers = #tpu.dot_dimension_numbers<[2], [1], [1], [2], [0, 0, 0, 1, 1, 2], [0], [0]>} : vector<8x8x32xf32>, vector<8x32x8xf32>, vector<8x8x8xf32> -> vector<8x8x8xf32>
    "tpu.trace_stop"() : () -> ()
    "tpu.trace_start"() <{level = 10 : i32, message = "gnk,gmk->gnm"}> : () -> ()
    %cst_13 = arith.constant dense<0.000000e+00> : vector<8x8x8xf32>
    %15 = tpu.matmul %11, %14, %cst_13 {dimension_numbers = #tpu.dot_dimension_numbers<[2], [2], [1], [1], [0, 0, 0, 1, 1, 1], [0], [0]>} : vector<8x8x8xf32>, vector<8x8x8xf32>, vector<8x8x8xf32> -> vector<8x8x8xf32>
    "tpu.trace_stop"() : () -> ()
    %cst_14 = arith.constant dense<0xFF800000> : vector<8x8xf32>
    %16 = vector.multi_reduction <maximumf>, %15, %cst_14 [2] : vector<8x8x8xf32> to vector<8x8xf32>
    %17 = vector.shape_cast %16 : vector<8x8xf32> to vector<8x8x1xf32>
    %18 = vector.broadcast %17 : vector<8x8x1xf32> to vector<8x8x8xf32>
    %19 = arith.subf %15, %18 : vector<8x8x8xf32>
    %20 = math.exp %19 : vector<8x8x8xf32>
    %cst_15 = arith.constant dense<0.000000e+00> : vector<8x8xf32>
    %21 = vector.multi_reduction <add>, %20, %cst_15 [2] : vector<8x8x8xf32> to vector<8x8xf32>
    %22 = vector.shape_cast %21 : vector<8x8xf32> to vector<8x8x1xf32>
    %23 = tpu.reciprocal %22 {approx = true} : vector<8x8x1xf32> -> vector<8x8x1xf32>
    %24 = vector.broadcast %23 : vector<8x8x1xf32> to vector<8x8x8xf32>
    %25 = arith.mulf %20, %24 : vector<8x8x8xf32>
    %c0_16 = arith.constant 0 : index
    %c0_17 = arith.constant 0 : index
    %c0_18 = arith.constant 0 : index
    %26 = vector.load %arg3[%c0_16, %c0_17, %c0_18] : memref<8x32x32xf32, #tpu.memory_space<vmem>>, vector<8x32x32xf32>
    "tpu.trace_start"() <{level = 10 : i32, message = "gnd,gde->gne"}> : () -> ()
    %cst_19 = arith.constant dense<0.000000e+00> : vector<8x8x32xf32>
    %27 = tpu.matmul %5, %26, %cst_19 {dimension_numbers = #tpu.dot_dimension_numbers<[2], [1], [1], [2], [0, 0, 0, 1, 1, 2], [0], [0]>} : vector<8x8x32xf32>, vector<8x32x32xf32>, vector<8x8x32xf32> -> vector<8x8x32xf32>
    "tpu.trace_stop"() : () -> ()
    "tpu.trace_start"() <{level = 10 : i32, message = "gnm,gme->gne"}> : () -> ()
    %cst_20 = arith.constant dense<0.000000e+00> : vector<8x8x32xf32>
    %28 = tpu.matmul %25, %27, %cst_20 {dimension_numbers = #tpu.dot_dimension_numbers<[2], [1], [1], [2], [0, 0, 0, 1, 1, 2], [0], [0]>} : vector<8x8x8xf32>, vector<8x8x32xf32>, vector<8x8x32xf32> -> vector<8x8x32xf32>
    "tpu.trace_stop"() : () -> ()
    %29 = vector.shape_cast %28 : vector<8x8x32xf32> to vector<2x4x8x32xf32>
    %cst_21 = arith.constant dense<0.000000e+00> : vector<2x8x32xf32>
    %30 = vector.multi_reduction <add>, %29, %cst_21 [1] : vector<2x4x8x32xf32> to vector<2x8x32xf32>
    %31 = vector.shape_cast %30 : vector<2x8x32xf32> to vector<16x32xf32>
    %c0_22 = arith.constant 0 : index
    %c0_23 = arith.constant 0 : index
    %32 = vector.load %arg5[%c0_22, %c0_23] : memref<6x32xf32, #tpu.memory_space<vmem>>, vector<1x32xf32>
    %33 = vector.shape_cast %32 : vector<1x32xf32> to vector<32xf32>
    %34 = vector.shape_cast %33 : vector<32xf32> to vector<1x32xf32>
    %35 = vector.broadcast %34 : vector<1x32xf32> to vector<16x32xf32>
    %36 = arith.addf %31, %35 : vector<16x32xf32>
    %37 = arith.addf %1, %36 : vector<16x32xf32>
    %c2 = arith.constant 2 : index
    %c0_24 = arith.constant 0 : index
    %38 = vector.load %arg5[%c2, %c0_24] : memref<6x32xf32, #tpu.memory_space<vmem>>, vector<1x32xf32>
    %39 = vector.shape_cast %38 : vector<1x32xf32> to vector<32xf32>
    %c3 = arith.constant 3 : index
    %c0_25 = arith.constant 0 : index
    %40 = vector.load %arg5[%c3, %c0_25] : memref<6x32xf32, #tpu.memory_space<vmem>>, vector<1x32xf32>
    %41 = vector.shape_cast %40 : vector<1x32xf32> to vector<32xf32>
    %cst_26 = arith.constant dense<0.000000e+00> : vector<16xf32>
    %42 = vector.multi_reduction <add>, %37, %cst_26 [1] : vector<16x32xf32> to vector<16xf32>
    %43 = vector.shape_cast %42 : vector<16xf32> to vector<16x1xf32>
    %cst_27 = arith.constant 3.200000e+01 : f32
    %44 = vector.broadcast %cst_27 : f32 to vector<16x1xf32>
    %45 = arith.divf %43, %44 : vector<16x1xf32>
    %46 = vector.broadcast %45 : vector<16x1xf32> to vector<16x32xf32>
    %47 = arith.subf %37, %46 : vector<16x32xf32>
    %48 = arith.mulf %47, %47 : vector<16x32xf32>
    %cst_28 = arith.constant dense<0.000000e+00> : vector<16xf32>
    %49 = vector.multi_reduction <add>, %48, %cst_28 [1] : vector<16x32xf32> to vector<16xf32>
    %50 = vector.shape_cast %49 : vector<16xf32> to vector<16x1xf32>
    %cst_29 = arith.constant 3.200000e+01 : f32
    %51 = vector.broadcast %cst_29 : f32 to vector<16x1xf32>
    %52 = arith.divf %50, %51 : vector<16x1xf32>
    %53 = vector.broadcast %45 : vector<16x1xf32> to vector<16x32xf32>
    %54 = arith.subf %37, %53 : vector<16x32xf32>
    %cst_30 = arith.constant 9.99999974E-6 : f32
    %55 = vector.broadcast %cst_30 : f32 to vector<16x1xf32>
    %56 = arith.addf %52, %55 : vector<16x1xf32>
    %57 = math.rsqrt %56 : vector<16x1xf32>
    %58 = vector.broadcast %57 : vector<16x1xf32> to vector<16x32xf32>
    %59 = arith.mulf %54, %58 : vector<16x32xf32>
    %60 = vector.shape_cast %39 : vector<32xf32> to vector<1x32xf32>
    %61 = vector.broadcast %60 : vector<1x32xf32> to vector<16x32xf32>
    %62 = arith.mulf %59, %61 : vector<16x32xf32>
    %63 = vector.shape_cast %41 : vector<32xf32> to vector<1x32xf32>
    %64 = vector.broadcast %63 : vector<1x32xf32> to vector<16x32xf32>
    %65 = arith.addf %62, %64 : vector<16x32xf32>
    %c0_31 = arith.constant 0 : index
    %c0_32 = arith.constant 0 : index
    %66 = vector.load %arg4[%c0_31, %c0_32] : memref<32x32xf32, #tpu.memory_space<vmem>>, vector<32x32xf32>
    %cst_33 = arith.constant dense<0.000000e+00> : vector<16x32xf32>
    %67 = tpu.matmul %65, %66, %cst_33 {dimension_numbers = #tpu.dot_dimension_numbers<[1], [0], [0], [1], [0, 0, 1, 1], [], []>} : vector<16x32xf32>, vector<32x32xf32>, vector<16x32xf32> -> vector<16x32xf32>
    %c1_34 = arith.constant 1 : index
    %c0_35 = arith.constant 0 : index
    %68 = vector.load %arg5[%c1_34, %c0_35] : memref<6x32xf32, #tpu.memory_space<vmem>>, vector<1x32xf32>
    %69 = vector.shape_cast %68 : vector<1x32xf32> to vector<32xf32>
    %70 = vector.shape_cast %69 : vector<32xf32> to vector<1x32xf32>
    %71 = vector.broadcast %70 : vector<1x32xf32> to vector<16x32xf32>
    %72 = arith.addf %67, %71 : vector<16x32xf32>
    %cst_36 = arith.constant 0.000000e+00 : f32
    %73 = vector.broadcast %cst_36 : f32 to vector<16x32xf32>
    %74 = arith.maximumf %72, %73 : vector<16x32xf32>
    %75 = arith.addf %65, %74 : vector<16x32xf32>
    %c4 = arith.constant 4 : index
    %c0_37 = arith.constant 0 : index
    %76 = vector.load %arg5[%c4, %c0_37] : memref<6x32xf32, #tpu.memory_space<vmem>>, vector<1x32xf32>
    %77 = vector.shape_cast %76 : vector<1x32xf32> to vector<32xf32>
    %c5 = arith.constant 5 : index
    %c0_38 = arith.constant 0 : index
    %78 = vector.load %arg5[%c5, %c0_38] : memref<6x32xf32, #tpu.memory_space<vmem>>, vector<1x32xf32>
    %79 = vector.shape_cast %78 : vector<1x32xf32> to vector<32xf32>
    %cst_39 = arith.constant dense<0.000000e+00> : vector<16xf32>
    %80 = vector.multi_reduction <add>, %75, %cst_39 [1] : vector<16x32xf32> to vector<16xf32>
    %81 = vector.shape_cast %80 : vector<16xf32> to vector<16x1xf32>
    %cst_40 = arith.constant 3.200000e+01 : f32
    %82 = vector.broadcast %cst_40 : f32 to vector<16x1xf32>
    %83 = arith.divf %81, %82 : vector<16x1xf32>
    %84 = vector.broadcast %83 : vector<16x1xf32> to vector<16x32xf32>
    %85 = arith.subf %75, %84 : vector<16x32xf32>
    %86 = arith.mulf %85, %85 : vector<16x32xf32>
    %cst_41 = arith.constant dense<0.000000e+00> : vector<16xf32>
    %87 = vector.multi_reduction <add>, %86, %cst_41 [1] : vector<16x32xf32> to vector<16xf32>
    %88 = vector.shape_cast %87 : vector<16xf32> to vector<16x1xf32>
    %cst_42 = arith.constant 3.200000e+01 : f32
    %89 = vector.broadcast %cst_42 : f32 to vector<16x1xf32>
    %90 = arith.divf %88, %89 : vector<16x1xf32>
    %91 = vector.broadcast %83 : vector<16x1xf32> to vector<16x32xf32>
    %92 = arith.subf %75, %91 : vector<16x32xf32>
    %cst_43 = arith.constant 9.99999974E-6 : f32
    %93 = vector.broadcast %cst_43 : f32 to vector<16x1xf32>
    %94 = arith.addf %90, %93 : vector<16x1xf32>
    %95 = math.rsqrt %94 : vector<16x1xf32>
    %96 = vector.broadcast %95 : vector<16x1xf32> to vector<16x32xf32>
    %97 = arith.mulf %92, %96 : vector<16x32xf32>
    %98 = vector.shape_cast %77 : vector<32xf32> to vector<1x32xf32>
    %99 = vector.broadcast %98 : vector<1x32xf32> to vector<16x32xf32>
    %100 = arith.mulf %97, %99 : vector<16x32xf32>
    %101 = vector.shape_cast %79 : vector<32xf32> to vector<1x32xf32>
    %102 = vector.broadcast %101 : vector<1x32xf32> to vector<16x32xf32>
    %103 = arith.addf %100, %102 : vector<16x32xf32>
    %104 = vector.shape_cast %103 : vector<16x32xf32> to vector<2x8x32xf32>
    %c0_44 = arith.constant 0 : index
    %c0_45 = arith.constant 0 : index
    %c0_46 = arith.constant 0 : index
    %105 = vector.load %arg6[%c0_44, %c0_45, %c0_46] : memref<2x8x32xf32, #tpu.memory_space<vmem>>, vector<2x8x32xf32>
    tpu.vector_store %arg6[%c0_44, %c0_45, %c0_46], %104 {strides = array<i32>} : memref<2x8x32xf32, #tpu.memory_space<vmem>>, vector<2x8x32xf32>,
    return
  }
}

</mosaic_0001>

<llo_original>
// kernel: sab_forward.1
$region0: #{sab_forward.1}
  #allocation0 [shape = 'u32[]', space=smem, size = 0x4, offset = 0x4, fixed_abs, tag = 'smem constant byte address 0x4 - core index']
  #allocation1 [shape = 'u32[72,128]{1,0:T(1,128)}', space=vmem, size = 0x9000, scoped, tag = 'internal scratch']
  %s0 = inlined_call_operand.vmem [shape: f32[2,8,32], index: 0, kind: input, shape index: {}]
  %s1 = inlined_call_operand.vmem [shape: f32[2,8,32,8], index: 1, kind: input, shape index: {}]
  %s2 = inlined_call_operand.vmem [shape: f32[8,1,8], index: 2, kind: input, shape index: {}]
  %s3 = inlined_call_operand.vmem [shape: f32[8,32,32], index: 3, kind: input, shape index: {}]
  %s4 = inlined_call_operand.vmem [shape: f32[32,32], index: 4, kind: input, shape index: {}]
  %s5 = inlined_call_operand.vmem [shape: f32[6,32], index: 5, kind: input, shape index: {}]
  %s6 = inlined_call_operand.hbm [shape: f32[2,8,32], index: 6, kind: output, shape index: {}]
  %s7 = sld [smem:[#allocation0]]
  $region34: #{sab_forward.1} parent=0
    _
  %s9 = ssub.s32 1, %s7
  %s10 = scalar_select 0, %s9, %s7
  $region1: #{sab_forward.1} parent=0
    #allocation2 [shape = 'u8[8192]{0}', space=vmem, size = 0x2000, scoped, tag = 'output window, operand 0, single buffered']
    #allocation3 [shape = 's32[1]{0}', space=sflag, size = 0x4, scoped, tag = 'scoped memory for sab_forward.1']
    %11 = vsyncpa [#allocation3], 0
    // Predicated region
    $region2: #{sab_forward.1} parent=1 // pred_check
      _
    $region3: #{sab_forward.1} parent=1 // pred_check_branch
      %13 = sbr.rel (0) target = $region5
    $region4: #{sab_forward.1} parent=1 // pred_region
      _
    $region5: #{sab_forward.1} parent=1 // pred_fallthru
      _
    // Predicated region
    $region6: #{sab_forward.1} parent=1 // pred_check
      _
    $region7: #{sab_forward.1} parent=1 // pred_check_branch
      %15 = sbr.rel (0) target = $region9
    $region8: #{sab_forward.1} parent=1 // pred_region
      _
    $region9: #{sab_forward.1} parent=1 // pred_fallthru
      _
    // Predicated region
    $region10: #{sab_forward.1} parent=1 // pred_check
      _
    $region11: #{sab_forward.1} parent=1 // pred_check_branch
      %17 = sbr.rel (0) target = $region13
    $region12: #{sab_forward.1} parent=1 // pred_region
      _
    $region13: #{sab_forward.1} parent=1 // pred_fallthru
      _
    // Predicated region
    $region14: #{sab_forward.1} parent=1 // pred_check
      _
    $region15: #{sab_forward.1} parent=1 // pred_check_branch
      %19 = sbr.rel (0) target = $region17
    $region16: #{sab_forward.1} parent=1 // pred_region
      _
    $region17: #{sab_forward.1} parent=1 // pred_fallthru
      _
    // Predicated region
    $region18: #{sab_forward.1} parent=1 // pred_check
      _
    $region19: #{sab_forward.1} parent=1 // pred_check_branch
      %21 = sbr.rel (0) target = $region21
    $region20: #{sab_forward.1} parent=1 // pred_region
      _
    $region21: #{sab_forward.1} parent=1 // pred_fallthru
      _
    // Predicated region
    $region22: #{sab_forward.1} parent=1 // pred_check
      _
    $region23: #{sab_forward.1} parent=1 // pred_check_branch
      %23 = sbr.rel (0) target = $region25
    $region24: #{sab_forward.1} parent=1 // pred_region
      _
    $region25: #{sab_forward.1} parent=1 // pred_fallthru
      _
    %v24 = vld [vmem:[%s0] sm:$0xff]
    %v25 = vld [vmem:[%s0 + $0x8] sm:$0xff]
    %v26 = vld [vmem:[%s1] sm:$0xff]
    %v27 = vld [vmem:[%s1 + $0x8] sm:$0xff]
    %v28 = vld [vmem:[%s1 + $0x10] sm:$0xff]
    %v29 = vld [vmem:[%s1 + $0x18] sm:$0xff]
    %v30 = vld [vmem:[%s1 + $0x20] sm:$0xff]
    %v31 = vld [vmem:[%s1 + $0x28] sm:$0xff]
    %v32 = vld [vmem:[%s1 + $0x30] sm:$0xff]
    %v33 = vld [vmem:[%s1 + $0x38] sm:$0xff]
    %v34 = vld [vmem:[%s1 + $0x40] sm:$0xff]
    %v35 = vld [vmem:[%s1 + $0x48] sm:$0xff]
    %v36 = vld [vmem:[%s1 + $0x50] sm:$0xff]
    %v37 = vld [vmem:[%s1 + $0x58] sm:$0xff]
    %v38 = vld [vmem:[%s1 + $0x60] sm:$0xff]
    %v39 = vld [vmem:[%s1 + $0x68] sm:$0xff]
    %v40 = vld [vmem:[%s1 + $0x70] sm:$0xff]
    %v41 = vld [vmem:[%s1 + $0x78] sm:$0xff]
    %v42 = vld [vmem:[%s1 + $0x80] sm:$0xff]
    %v43 = vld [vmem:[%s1 + $0x88] sm:$0xff]
    %v44 = vld [vmem:[%s1 + $0x90] sm:$0xff]
    %v45 = vld [vmem:[%s1 + $0x98] sm:$0xff]
    %v46 = vld [vmem:[%s1 + $0xa0] sm:$0xff]
    %v47 = vld [vmem:[%s1 + $0xa8] sm:$0xff]
    %v48 = vld [vmem:[%s1 + $0xb0] sm:$0xff]
    %v49 = vld [vmem:[%s1 + $0xb8] sm:$0xff]
    %v50 = vld [vmem:[%s1 + $0xc0] sm:$0xff]
    %v51 = vld [vmem:[%s1 + $0xc8] sm:$0xff]
    %v52 = vld [vmem:[%s1 + $0xd0] sm:$0xff]
    %v53 = vld [vmem:[%s1 + $0xd8] sm:$0xff]
    %v54 = vld [vmem:[%s1 + $0xe0] sm:$0xff]
    %v55 = vld [vmem:[%s1 + $0xe8] sm:$0xff]
    %v56 = vld [vmem:[%s1 + $0xf0] sm:$0xff]
    %v57 = vld [vmem:[%s1 + $0xf8] sm:$0xff]
    %v58 = vld [vmem:[%s2] sm:$0x1]
    %v59 = vld [vmem:[%s2 + $0x1] sm:$0x1]
    %v60 = vld [vmem:[%s2 + $0x2] sm:$0x1]
    %v61 = vld [vmem:[%s2 + $0x3] sm:$0x1]
    %v62 = vld [vmem:[%s2 + $0x4] sm:$0x1]
    %v63 = vld [vmem:[%s2 + $0x5] sm:$0x1]
    %v64 = vld [vmem:[%s2 + $0x6] sm:$0x1]
    %v65 = vld [vmem:[%s2 + $0x7] sm:$0x1]
    %v74 = vperm.slane %v58, 0
    %v75 = vperm.slane %v59, 0
    %v76 = vperm.slane %v60, 0
    %v77 = vperm.slane %v61, 0
    %v78 = vperm.slane %v62, 0
    %v79 = vperm.slane %v63, 0
    %v80 = vperm.slane %v64, 0
    %v81 = vperm.slane %v65, 0
    %vm90 = vcmask 261120
    %v92 = vsel %vm90, %v24, 0
    %94 = vmatpush.msra.mxu0 0.0
    %95 = vmatpush.msra.mxu0 0.0
    %96 = vmatpush.msra.mxu0 0.0
    %97 = vmatpush.msra.mxu0 0.0
    %98 = vmatpush.msra.mxu0 0.0
    %99 = vmatpush.msra.mxu0 0.0
    %100 = vmatpush.msra.mxu0 0.0
    %101 = vmatpush.msra.mxu0 0.0
    %102 = vmatpush.msra.mxu0 0.0
    %103 = vmatpush.msra.mxu0 0.0
    %104 = vmatpush.msra.mxu0 0.0
    %105 = vmatpush.msra.mxu0 0.0
    %106 = vmatpush.msra.mxu0 %v29
    %107 = vmatpush.msra.mxu0 %v28
    %108 = vmatpush.msra.mxu0 %v27
    %109 = vmatpush.msra.mxu0 %v26
    %110 = vmatmul.f32.gmra.mxu0 %v92
    %v111 = vpop.f32.mrf.mxu0
    %v112 = vadd.f32 %v74, %v111
    %113 = vdwg.mxu0
    %114 = vmatpush.msra.mxu0 0.0
    %115 = vmatpush.msra.mxu0 0.0
    %116 = vmatpush.msra.mxu0 0.0
    %117 = vmatpush.msra.mxu0 0.0
    %118 = vmatpush.msra.mxu0 0.0
    %119 = vmatpush.msra.mxu0 0.0
    %120 = vmatpush.msra.mxu0 0.0
    %121 = vmatpush.msra.mxu0 0.0
    %122 = vmatpush.msra.mxu0 0.0
    %123 = vmatpush.msra.mxu0 0.0
    %124 = vmatpush.msra.mxu0 0.0
    %125 = vmatpush.msra.mxu0 0.0
    %126 = vmatpush.msra.mxu0 %v33
    %127 = vmatpush.msra.mxu0 %v32
    %128 = vmatpush.msra.mxu0 %v31
    %129 = vmatpush.msra.mxu0 %v30
    %130 = vmatmul.f32.gmra.mxu0 %v92
    %v131 = vpop.f32.mrf.mxu0
    %v132 = vadd.f32 %v75, %v131
    %133 = vdwg.mxu0
    %134 = vmatpush.msra.mxu0 0.0
    %135 = vmatpush.msra.mxu0 0.0
    %136 = vmatpush.msra.mxu0 0.0
    %137 = vmatpush.msra.mxu0 0.0
    %138 = vmatpush.msra.mxu0 0.0
    %139 = vmatpush.msra.mxu0 0.0
    %140 = vmatpush.msra.mxu0 0.0
    %141 = vmatpush.msra.mxu0 0.0
    %142 = vmatpush.msra.mxu0 0.0
    %143 = vmatpush.msra.mxu0 0.0
    %144 = vmatpush.msra.mxu0 0.0
    %145 = vmatpush.msra.mxu0 0.0
    %146 = vmatpush.msra.mxu0 %v37
    %147 = vmatpush.msra.mxu0 %v36
    %148 = vmatpush.msra.mxu0 %v35
    %149 = vmatpush.msra.mxu0 %v34
    %150 = vmatmul.f32.gmra.mxu0 %v92
    %v151 = vpop.f32.mrf.mxu0
    %v152 = vadd.f32 %v76, %v151
    %153 = vdwg.mxu0
    %154 = vmatpush.msra.mxu0 0.0
    %155 = vmatpush.msra.mxu0 0.0
    %156 = vmatpush.msra.mxu0 0.0
    %157 = vmatpush.msra.mxu0 0.0
    %158 = vmatpush.msra.mxu0 0.0
    %159 = vmatpush.msra.mxu0 0.0
    %160 = vmatpush.msra.mxu0 0.0
    %161 = vmatpush.msra.mxu0 0.0
    %162 = vmatpush.msra.mxu0 0.0
    %163 = vmatpush.msra.mxu0 0.0
    %164 = vmatpush.msra.mxu0 0.0
    %165 = vmatpush.msra.mxu0 0.0
    %166 = vmatpush.msra.mxu0 %v41
    %167 = vmatpush.msra.mxu0 %v40
    %168 = vmatpush.msra.mxu0 %v39
    %169 = vmatpush.msra.mxu0 %v38
    %170 = vmatmul.f32.gmra.mxu0 %v92
    %v171 = vpop.f32.mrf.mxu0
    %v172 = vadd.f32 %v77, %v171
    %173 = vdwg.mxu0
    %v175 = vsel %vm90, %v25, 0
    %177 = vmatpush.msra.mxu0 0.0
    %178 = vmatpush.msra.mxu0 0.0
    %179 = vmatpush.msra.mxu0 0.0
    %180 = vmatpush.msra.mxu0 0.0
    %181 = vmatpush.msra.mxu0 0.0
    %182 = vmatpush.msra.mxu0 0.0
    %183 = vmatpush.msra.mxu0 0.0
    %184 = vmatpush.msra.mxu0 0.0
    %185 = vmatpush.msra.mxu0 0.0
    %186 = vmatpush.msra.mxu0 0.0
    %187 = vmatpush.msra.mxu0 0.0
    %188 = vmatpush.msra.mxu0 0.0
    %189 = vmatpush.msra.mxu0 %v45
    %190 = vmatpush.msra.mxu0 %v44
    %191 = vmatpush.msra.mxu0 %v43
    %192 = vmatpush.msra.mxu0 %v42
    %193 = vmatmul.f32.gmra.mxu0 %v175
    %v194 = vpop.f32.mrf.mxu0
    %v195 = vadd.f32 %v78, %v194
    %196 = vdwg.mxu0
    %197 = vmatpush.msra.mxu0 0.0
    %198 = vmatpush.msra.mxu0 0.0
    %199 = vmatpush.msra.mxu0 0.0
    %200 = vmatpush.msra.mxu0 0.0
    %201 = vmatpush.msra.mxu0 0.0
    %202 = vmatpush.msra.mxu0 0.0
    %203 = vmatpush.msra.mxu0 0.0
    %204 = vmatpush.msra.mxu0 0.0
    %205 = vmatpush.msra.mxu0 0.0
    %206 = vmatpush.msra.mxu0 0.0
    %207 = vmatpush.msra.mxu0 0.0
    %208 = vmatpush.msra.mxu0 0.0
    %209 = vmatpush.msra.mxu0 %v49
    %210 = vmatpush.msra.mxu0 %v48
    %211 = vmatpush.msra.mxu0 %v47
    %212 = vmatpush.msra.mxu0 %v46
    %213 = vmatmul.f32.gmra.mxu0 %v175
    %v214 = vpop.f32.mrf.mxu0
    %v215 = vadd.f32 %v79, %v214
    %216 = vdwg.mxu0
    %217 = vmatpush.msra.mxu0 0.0
    %218 = vmatpush.msra.mxu0 0.0
    %219 = vmatpush.msra.mxu0 0.0
    %220 = vmatpush.msra.mxu0 0.0
    %221 = vmatpush.msra.mxu0 0.0
    %222 = vmatpush.msra.mxu0 0.0
    %223 = vmatpush.msra.mxu0 0.0
    %224 = vmatpush.msra.mxu0 0.0
    %225 = vmatpush.msra.mxu0 0.0
    %226 = vmatpush.msra.mxu0 0.0
    %227 = vmatpush.msra.mxu0 0.0
    %228 = vmatpush.msra.mxu0 0.0
    %229 = vmatpush.msra.mxu0 %v53
    %230 = vmatpush.msra.mxu0 %v52
    %231 = vmatpush.msra.mxu0 %v51
    %232 = vmatpush.msra.mxu0 %v50
    %233 = vmatmul.f32.gmra.mxu0 %v175
    %v234 = vpop.f32.mrf.mxu0
    %v235 = vadd.f32 %v80, %v234
    %236 = vdwg.mxu0
    %237 = vmatpush.msra.mxu0 0.0
    %238 = vmatpush.msra.mxu0 0.0
    %239 = vmatpush.msra.mxu0 0.0
    %240 = vmatpush.msra.mxu0 0.0
    %241 = vmatpush.msra.mxu0 0.0
    %242 = vmatpush.msra.mxu0 0.0
    %243 = vmatpush.msra.mxu0 0.0
    %244 = vmatpush.msra.mxu0 0.0
    %245 = vmatpush.msra.mxu0 0.0
    %246 = vmatpush.msra.mxu0 0.0
    %247 = vmatpush.msra.mxu0 0.0
    %248 = vmatpush.msra.mxu0 0.0
    %249 = vmatpush.msra.mxu0 %v57
    %250 = vmatpush.msra.mxu0 %v56
    %251 = vmatpush.msra.mxu0 %v55
    %252 = vmatpush.msra.mxu0 %v54
    %253 = vmatmul.f32.gmra.mxu0 %v175
    %v254 = vpop.f32.mrf.mxu0
    %v255 = vadd.f32 %v81, %v254
    %256 = vdwg.mxu0
    %s257 = scalar_lea.vmem %s1, 256
    %v258 = vld [vmem:[%s257] sm:$0xff]
    %v259 = vld [vmem:[%s257 + $0x8] sm:$0xff]
    %v260 = vld [vmem:[%s257 + $0x10] sm:$0xff]
    %v261 = vld [vmem:[%s257 + $0x18] sm:$0xff]
    %v262 = vld [vmem:[%s257 + $0x20] sm:$0xff]
    %v263 = vld [vmem:[%s257 + $0x28] sm:$0xff]
    %v264 = vld [vmem:[%s257 + $0x30] sm:$0xff]
    %v265 = vld [vmem:[%s257 + $0x38] sm:$0xff]
    %v266 = vld [vmem:[%s257 + $0x40] sm:$0xff]
    %v267 = vld [vmem:[%s257 + $0x48] sm:$0xff]
    %v268 = vld [vmem:[%s257 + $0x50] sm:$0xff]
    %v269 = vld [vmem:[%s257 + $0x58] sm:$0xff]
    %v270 = vld [vmem:[%s257 + $0x60] sm:$0xff]
    %v271 = vld [vmem:[%s257 + $0x68] sm:$0xff]
    %v272 = vld [vmem:[%s257 + $0x70] sm:$0xff]
    %v273 = vld [vmem:[%s257 + $0x78] sm:$0xff]
    %v274 = vld [vmem:[%s257 + $0x80] sm:$0xff]
    %v275 = vld [vmem:[%s257 + $0x88] sm:$0xff]
    %v276 = vld [vmem:[%s257 + $0x90] sm:$0xff]
    %v277 = vld [vmem:[%s257 + $0x98] sm:$0xff]
    %v278 = vld [vmem:[%s257 + $0xa0] sm:$0xff]
    %v279 = vld [vmem:[%s257 + $0xa8] sm:$0xff]
    %v280 = vld [vmem:[%s257 + $0xb0] sm:$0xff]
    %v281 = vld [vmem:[%s257 + $0xb8] sm:$0xff]
    %v282 = vld [vmem:[%s257 + $0xc0] sm:$0xff]
    %v283 = vld [vmem:[%s257 + $0xc8] sm:$0xff]
    %v284 = vld [vmem:[%s257 + $0xd0] sm:$0xff]
    %v285 = vld [vmem:[%s257 + $0xd8] sm:$0xff]
    %v286 = vld [vmem:[%s257 + $0xe0] sm:$0xff]
    %v287 = vld [vmem:[%s257 + $0xe8] sm:$0xff]
    %v288 = vld [vmem:[%s257 + $0xf0] sm:$0xff]
    %v289 = vld [vmem:[%s257 + $0xf8] sm:$0xff]
    %290 = vmatpush.msra.mxu0 0.0
    %291 = vmatpush.msra.mxu0 0.0
    %292 = vmatpush.msra.mxu0 0.0
    %293 = vmatpush.msra.mxu0 0.0
    %294 = vmatpush.msra.mxu0 0.0
    %295 = vmatpush.msra.mxu0 0.0
    %296 = vmatpush.msra.mxu0 0.0
    %297 = vmatpush.msra.mxu0 0.0
    %298 = vmatpush.msra.mxu0 0.0
    %299 = vmatpush.msra.mxu0 0.0
    %300 = vmatpush.msra.mxu0 0.0
    %301 = vmatpush.msra.mxu0 0.0
    %302 = vmatpush.msra.mxu0 %v261
    %303 = vmatpush.msra.mxu0 %v260
    %304 = vmatpush.msra.mxu0 %v259
    %305 = vmatpush.msra.mxu0 %v258
    %306 = vmatmul.f32.gmra.mxu0 %v92
    %v307 = vpop.f32.mrf.mxu0
    %v308 = vadd.f32 0.0, %v307
    %309 = vdwg.mxu0
    %310 = vmatpush.msra.mxu0 0.0
    %311 = vmatpush.msra.mxu0 0.0
    %312 = vmatpush.msra.mxu0 0.0
    %313 = vmatpush.msra.mxu0 0.0
    %314 = vmatpush.msra.mxu0 0.0
    %315 = vmatpush.msra.mxu0 0.0
    %316 = vmatpush.msra.mxu0 0.0
    %317 = vmatpush.msra.mxu0 0.0
    %318 = vmatpush.msra.mxu0 0.0
    %319 = vmatpush.msra.mxu0 0.0
    %320 = vmatpush.msra.mxu0 0.0
    %321 = vmatpush.msra.mxu0 0.0
    %322 = vmatpush.msra.mxu0 %v265
    %323 = vmatpush.msra.mxu0 %v264
    %324 = vmatpush.msra.mxu0 %v263
    %325 = vmatpush.msra.mxu0 %v262
    %326 = vmatmul.f32.gmra.mxu0 %v92
    %v327 = vpop.f32.mrf.mxu0
    %v328 = vadd.f32 0.0, %v327
    %329 = vdwg.mxu0
    %330 = vmatpush.msra.mxu0 0.0
    %331 = vmatpush.msra.mxu0 0.0
    %332 = vmatpush.msra.mxu0 0.0
    %333 = vmatpush.msra.mxu0 0.0
    %334 = vmatpush.msra.mxu0 0.0
    %335 = vmatpush.msra.mxu0 0.0
    %336 = vmatpush.msra.mxu0 0.0
    %337 = vmatpush.msra.mxu0 0.0
    %338 = vmatpush.msra.mxu0 0.0
    %339 = vmatpush.msra.mxu0 0.0
    %340 = vmatpush.msra.mxu0 0.0
    %341 = vmatpush.msra.mxu0 0.0
    %342 = vmatpush.msra.mxu0 %v269
    %343 = vmatpush.msra.mxu0 %v268
    %344 = vmatpush.msra.mxu0 %v267
    %345 = vmatpush.msra.mxu0 %v266
    %346 = vmatmul.f32.gmra.mxu0 %v92
    %v347 = vpop.f32.mrf.mxu0
    %v348 = vadd.f32 0.0, %v347
    %349 = vdwg.mxu0
    %350 = vmatpush.msra.mxu0 0.0
    %351 = vmatpush.msra.mxu0 0.0
    %352 = vmatpush.msra.mxu0 0.0
    %353 = vmatpush.msra.mxu0 0.0
    %354 = vmatpush.msra.mxu0 0.0
    %355 = vmatpush.msra.mxu0 0.0
    %356 = vmatpush.msra.mxu0 0.0
    %357 = vmatpush.msra.mxu0 0.0
    %358 = vmatpush.msra.mxu0 0.0
    %359 = vmatpush.msra.mxu0 0.0
    %360 = vmatpush.msra.mxu0 0.0
    %361 = vmatpush.msra.mxu0 0.0
    %362 = vmatpush.msra.mxu0 %v273
    %363 = vmatpush.msra.mxu0 %v272
    %364 = vmatpush.msra.mxu0 %v271
    %365 = vmatpush.msra.mxu0 %v270
    %366 = vmatmul.f32.gmra.mxu0 %v92
    %v367 = vpop.f32.mrf.mxu0
    %v368 = vadd.f32 0.0, %v367
    %369 = vdwg.mxu0
    %370 = vmatpush.msra.mxu0 0.0
    %371 = vmatpush.msra.mxu0 0.0
    %372 = vmatpush.msra.mxu0 0.0
    %373 = vmatpush.msra.mxu0 0.0
    %374 = vmatpush.msra.mxu0 0.0
    %375 = vmatpush.msra.mxu0 0.0
    %376 = vmatpush.msra.mxu0 0.0
    %377 = vmatpush.msra.mxu0 0.0
    %378 = vmatpush.msra.mxu0 0.0
    %379 = vmatpush.msra.mxu0 0.0
    %380 = vmatpush.msra.mxu0 0.0
    %381 = vmatpush.msra.mxu0 0.0
    %382 = vmatpush.msra.mxu0 %v277
    %383 = vmatpush.msra.mxu0 %v276
    %384 = vmatpush.msra.mxu0 %v275
    %385 = vmatpush.msra.mxu0 %v274
    %386 = vmatmul.f32.gmra.mxu0 %v175
    %v387 = vpop.f32.mrf.mxu0
    %v388 = vadd.f32 0.0, %v387
    %389 = vdwg.mxu0
    %390 = vmatpush.msra.mxu0 0.0
    %391 = vmatpush.msra.mxu0 0.0
    %392 = vmatpush.msra.mxu0 0.0
    %393 = vmatpush.msra.mxu0 0.0
    %394 = vmatpush.msra.mxu0 0.0
    %395 = vmatpush.msra.mxu0 0.0
    %396 = vmatpush.msra.mxu0 0.0
    %397 = vmatpush.msra.mxu0 0.0
    %398 = vmatpush.msra.mxu0 0.0
    %399 = vmatpush.msra.mxu0 0.0
    %400 = vmatpush.msra.mxu0 0.0
    %401 = vmatpush.msra.mxu0 0.0
    %402 = vmatpush.msra.mxu0 %v281
    %403 = vmatpush.msra.mxu0 %v280
    %404 = vmatpush.msra.mxu0 %v279
    %405 = vmatpush.msra.mxu0 %v278
    %406 = vmatmul.f32.gmra.mxu0 %v175
    %v407 = vpop.f32.mrf.mxu0
    %v408 = vadd.f32 0.0, %v407
    %409 = vdwg.mxu0
    %410 = vmatpush.msra.mxu0 0.0
    %411 = vmatpush.msra.mxu0 0.0
    %412 = vmatpush.msra.mxu0 0.0
    %413 = vmatpush.msra.mxu0 0.0
    %414 = vmatpush.msra.mxu0 0.0
    %415 = vmatpush.msra.mxu0 0.0
    %416 = vmatpush.msra.mxu0 0.0
    %417 = vmatpush.msra.mxu0 0.0
    %418 = vmatpush.msra.mxu0 0.0
    %419 = vmatpush.msra.mxu0 0.0
    %420 = vmatpush.msra.mxu0 0.0
    %421 = vmatpush.msra.mxu0 0.0
    %422 = vmatpush.msra.mxu0 %v285
    %423 = vmatpush.msra.mxu0 %v284
    %424 = vmatpush.msra.mxu0 %v283
    %425 = vmatpush.msra.mxu0 %v282
    %426 = vmatmul.f32.gmra.mxu0 %v175
    %v427 = vpop.f32.mrf.mxu0
    %v428 = vadd.f32 0.0, %v427
    %429 = vdwg.mxu0
    %430 = vmatpush.msra.mxu0 0.0
    %431 = vmatpush.msra.mxu0 0.0
    %432 = vmatpush.msra.mxu0 0.0
    %433 = vmatpush.msra.mxu0 0.0
    %434 = vmatpush.msra.mxu0 0.0
    %435 = vmatpush.msra.mxu0 0.0
    %436 = vmatpush.msra.mxu0 0.0
    %437 = vmatpush.msra.mxu0 0.0
    %438 = vmatpush.msra.mxu0 0.0
    %439 = vmatpush.msra.mxu0 0.0
    %440 = vmatpush.msra.mxu0 0.0
    %441 = vmatpush.msra.mxu0 0.0
    %442 = vmatpush.msra.mxu0 %v289
    %443 = vmatpush.msra.mxu0 %v288
    %444 = vmatpush.msra.mxu0 %v287
    %445 = vmatpush.msra.mxu0 %v286
    %446 = vmatmul.f32.gmra.mxu0 %v175
    %v447 = vpop.f32.mrf.mxu0
    %v448 = vadd.f32 0.0, %v447
    %449 = vdwg.mxu0
    %vm450 = vcmask 64512
    %v452 = vsel %vm450, %v112, 0
    %v455 = vsel %vm450, %v308, 0
    %457 = vmatpush.xpose.msra.mxu0 0.0
    %458 = vmatpush.xpose.msra.mxu0 0.0
    %459 = vmatpush.xpose.msra.mxu0 0.0
    %460 = vmatpush.xpose.msra.mxu0 0.0
    %461 = vmatpush.xpose.msra.mxu0 0.0
    %462 = vmatpush.xpose.msra.mxu0 0.0
    %463 = vmatpush.xpose.msra.mxu0 0.0
    %464 = vmatpush.xpose.msra.mxu0 0.0
    %465 = vmatpush.xpose.msra.mxu0 0.0
    %466 = vmatpush.xpose.msra.mxu0 0.0
    %467 = vmatpush.xpose.msra.mxu0 0.0
    %468 = vmatpush.xpose.msra.mxu0 0.0
    %469 = vmatpush.xpose.msra.mxu0 0.0
    %470 = vmatpush.xpose.msra.mxu0 0.0
    %471 = vmatpush.xpose.msra.mxu0 0.0
    %472 = vmatpush.xpose.msra.mxu0 %v455
    %473 = vmatmul.f32.gmra.mxu0 %v452
    %v474 = vpop.f32.mrf.mxu0
    %v475 = vadd.f32 0.0, %v474
    %476 = vdwg.mxu0
    %v478 = vsel %vm450, %v132, 0
    %v481 = vsel %vm450, %v328, 0
    %483 = vmatpush.xpose.msra.mxu0 0.0
    %484 = vmatpush.xpose.msra.mxu0 0.0
    %485 = vmatpush.xpose.msra.mxu0 0.0
    %486 = vmatpush.xpose.msra.mxu0 0.0
    %487 = vmatpush.xpose.msra.mxu0 0.0
    %488 = vmatpush.xpose.msra.mxu0 0.0
    %489 = vmatpush.xpose.msra.mxu0 0.0
    %490 = vmatpush.xpose.msra.mxu0 0.0
    %491 = vmatpush.xpose.msra.mxu0 0.0
    %492 = vmatpush.xpose.msra.mxu0 0.0
    %493 = vmatpush.xpose.msra.mxu0 0.0
    %494 = vmatpush.xpose.msra.mxu0 0.0
    %495 = vmatpush.xpose.msra.mxu0 0.0
    %496 = vmatpush.xpose.msra.mxu0 0.0
    %497 = vmatpush.xpose.msra.mxu0 0.0
    %498 = vmatpush.xpose.msra.mxu0 %v481
    %499 = vmatmul.f32.gmra.mxu0 %v478
    %v500 = vpop.f32.mrf.mxu0
    %v501 = vadd.f32 0.0, %v500
    %502 = vdwg.mxu0
    %v504 = vsel %vm450, %v152, 0
    %v507 = vsel %vm450, %v348, 0
    %509 = vmatpush.xpose.msra.mxu0 0.0
    %510 = vmatpush.xpose.msra.mxu0 0.0
    %511 = vmatpush.xpose.msra.mxu0 0.0
    %512 = vmatpush.xpose.msra.mxu0 0.0
    %513 = vmatpush.xpose.msra.mxu0 0.0
    %514 = vmatpush.xpose.msra.mxu0 0.0
    %515 = vmatpush.xpose.msra.mxu0 0.0
    %516 = vmatpush.xpose.msra.mxu0 0.0
    %517 = vmatpush.xpose.msra.mxu0 0.0
    %518 = vmatpush.xpose.msra.mxu0 0.0
    %519 = vmatpush.xpose.msra.mxu0 0.0
    %520 = vmatpush.xpose.msra.mxu0 0.0
    %521 = vmatpush.xpose.msra.mxu0 0.0
    %522 = vmatpush.xpose.msra.mxu0 0.0
    %523 = vmatpush.xpose.msra.mxu0 0.0
    %524 = vmatpush.xpose.msra.mxu0 %v507
    %525 = vmatmul.f32.gmra.mxu0 %v504
    %v526 = vpop.f32.mrf.mxu0
    %v527 = vadd.f32 0.0, %v526
    %528 = vdwg.mxu0
    %v530 = vsel %vm450, %v172, 0
    %v533 = vsel %vm450, %v368, 0
    %535 = vmatpush.xpose.msra.mxu0 0.0
    %536 = vmatpush.xpose.msra.mxu0 0.0
    %537 = vmatpush.xpose.msra.mxu0 0.0
    %538 = vmatpush.xpose.msra.mxu0 0.0
    %539 = vmatpush.xpose.msra.mxu0 0.0
    %540 = vmatpush.xpose.msra.mxu0 0.0
    %541 = vmatpush.xpose.msra.mxu0 0.0
    %542 = vmatpush.xpose.msra.mxu0 0.0
    %543 = vmatpush.xpose.msra.mxu0 0.0
    %544 = vmatpush.xpose.msra.mxu0 0.0
    %545 = vmatpush.xpose.msra.mxu0 0.0
    %546 = vmatpush.xpose.msra.mxu0 0.0
    %547 = vmatpush.xpose.msra.mxu0 0.0
    %548 = vmatpush.xpose.msra.mxu0 0.0
    %549 = vmatpush.xpose.msra.mxu0 0.0
    %550 = vmatpush.xpose.msra.mxu0 %v533
    %551 = vmatmul.f32.gmra.mxu0 %v530
    %v552 = vpop.f32.mrf.mxu0
    %v553 = vadd.f32 0.0, %v552
    %554 = vdwg.mxu0
    %v556 = vsel %vm450, %v195, 0
    %v559 = vsel %vm450, %v388, 0
    %561 = vmatpush.xpose.msra.mxu0 0.0
    %562 = vmatpush.xpose.msra.mxu0 0.0
    %563 = vmatpush.xpose.msra.mxu0 0.0
    %564 = vmatpush.xpose.msra.mxu0 0.0
    %565 = vmatpush.xpose.msra.mxu0 0.0
    %566 = vmatpush.xpose.msra.mxu0 0.0
    %567 = vmatpush.xpose.msra.mxu0 0.0
    %568 = vmatpush.xpose.msra.mxu0 0.0
    %569 = vmatpush.xpose.msra.mxu0 0.0
    %570 = vmatpush.xpose.msra.mxu0 0.0
    %571 = vmatpush.xpose.msra.mxu0 0.0
    %572 = vmatpush.xpose.msra.mxu0 0.0
    %573 = vmatpush.xpose.msra.mxu0 0.0
    %574 = vmatpush.xpose.msra.mxu0 0.0
    %575 = vmatpush.xpose.msra.mxu0 0.0
    %576 = vmatpush.xpose.msra.mxu0 %v559
    %577 = vmatmul.f32.gmra.mxu0 %v556
    %v578 = vpop.f32.mrf.mxu0
    %v579 = vadd.f32 0.0, %v578
    %580 = vdwg.mxu0
    %v582 = vsel %vm450, %v215, 0
    %v585 = vsel %vm450, %v408, 0
    %587 = vmatpush.xpose.msra.mxu0 0.0
    %588 = vmatpush.xpose.msra.mxu0 0.0
    %589 = vmatpush.xpose.msra.mxu0 0.0
    %590 = vmatpush.xpose.msra.mxu0 0.0
    %591 = vmatpush.xpose.msra.mxu0 0.0
    %592 = vmatpush.xpose.msra.mxu0 0.0
    %593 = vmatpush.xpose.msra.mxu0 0.0
    %594 = vmatpush.xpose.msra.mxu0 0.0
    %595 = vmatpush.xpose.msra.mxu0 0.0
    %596 = vmatpush.xpose.msra.mxu0 0.0
    %597 = vmatpush.xpose.msra.mxu0 0.0
    %598 = vmatpush.xpose.msra.mxu0 0.0
    %599 = vmatpush.xpose.msra.mxu0 0.0
    %600 = vmatpush.xpose.msra.mxu0 0.0
    %601 = vmatpush.xpose.msra.mxu0 0.0
    %602 = vmatpush.xpose.msra.mxu0 %v585
    %603 = vmatmul.f32.gmra.mxu0 %v582
    %v604 = vpop.f32.mrf.mxu0
    %v605 = vadd.f32 0.0, %v604
    %606 = vdwg.mxu0
    %v608 = vsel %vm450, %v235, 0
    %v611 = vsel %vm450, %v428, 0
    %613 = vmatpush.xpose.msra.mxu0 0.0
    %614 = vmatpush.xpose.msra.mxu0 0.0
    %615 = vmatpush.xpose.msra.mxu0 0.0
    %616 = vmatpush.xpose.msra.mxu0 0.0
    %617 = vmatpush.xpose.msra.mxu0 0.0
    %618 = vmatpush.xpose.msra.mxu0 0.0
    %619 = vmatpush.xpose.msra.mxu0 0.0
    %620 = vmatpush.xpose.msra.mxu0 0.0
    %621 = vmatpush.xpose.msra.mxu0 0.0
    %622 = vmatpush.xpose.msra.mxu0 0.0
    %623 = vmatpush.xpose.msra.mxu0 0.0
    %624 = vmatpush.xpose.msra.mxu0 0.0
    %625 = vmatpush.xpose.msra.mxu0 0.0
    %626 = vmatpush.xpose.msra.mxu0 0.0
    %627 = vmatpush.xpose.msra.mxu0 0.0
    %628 = vmatpush.xpose.msra.mxu0 %v611
    %629 = vmatmul.f32.gmra.mxu0 %v608
    %v630 = vpop.f32.mrf.mxu0
    %v631 = vadd.f32 0.0, %v630
    %632 = vdwg.mxu0
    %v634 = vsel %vm450, %v255, 0
    %v637 = vsel %vm450, %v448, 0
    %639 = vmatpush.xpose.msra.mxu0 0.0
    %640 = vmatpush.xpose.msra.mxu0 0.0
    %641 = vmatpush.xpose.msra.mxu0 0.0
    %642 = vmatpush.xpose.msra.mxu0 0.0
    %643 = vmatpush.xpose.msra.mxu0 0.0
    %644 = vmatpush.xpose.msra.mxu0 0.0
    %645 = vmatpush.xpose.msra.mxu0 0.0
    %646 = vmatpush.xpose.msra.mxu0 0.0
    %647 = vmatpush.xpose.msra.mxu0 0.0
    %648 = vmatpush.xpose.msra.mxu0 0.0
    %649 = vmatpush.xpose.msra.mxu0 0.0
    %650 = vmatpush.xpose.msra.mxu0 0.0
    %651 = vmatpush.xpose.msra.mxu0 0.0
    %652 = vmatpush.xpose.msra.mxu0 0.0
    %653 = vmatpush.xpose.msra.mxu0 0.0
    %654 = vmatpush.xpose.msra.mxu0 %v637
    %655 = vmatmul.f32.gmra.mxu0 %v634
    %v656 = vpop.f32.mrf.mxu0
    %v657 = vadd.f32 0.0, %v656
    %658 = vdwg.mxu0
    %v659 = vsel %vm450, %v475, -inf
    %660 = vmax.xlane.f32.xlu0 %v659
    %v661 = vpop.xlane.xlu0 %660
    %v662 = vsel %vm450, %v501, -inf
    %663 = vmax.xlane.f32.xlu0 %v662
    %v664 = vpop.xlane.xlu0 %663
    %v665 = vsel %vm450, %v527, -inf
    %666 = vmax.xlane.f32.xlu0 %v665
    %v667 = vpop.xlane.xlu0 %666
    %v668 = vsel %vm450, %v553, -inf
    %669 = vmax.xlane.f32.xlu0 %v668
    %v670 = vpop.xlane.xlu0 %669
    %v671 = vsel %vm450, %v579, -inf
    %672 = vmax.xlane.f32.xlu0 %v671
    %v673 = vpop.xlane.xlu0 %672
    %v674 = vsel %vm450, %v605, -inf
    %675 = vmax.xlane.f32.xlu0 %v674
    %v676 = vpop.xlane.xlu0 %675
    %v677 = vsel %vm450, %v631, -inf
    %678 = vmax.xlane.f32.xlu0 %v677
    %v679 = vpop.xlane.xlu0 %678
    %v680 = vsel %vm450, %v657, -inf
    %681 = vmax.xlane.f32.xlu0 %v680
    %v682 = vpop.xlane.xlu0 %681
    %v683 = vsub.f32 %v475, %v661
    %v684 = vsub.f32 %v501, %v664
    %v685 = vsub.f32 %v527, %v667
    %v686 = vsub.f32 %v553, %v670
    %v687 = vsub.f32 %v579, %v673
    %v688 = vsub.f32 %v605, %v676
    %v689 = vsub.f32 %v631, %v679
    %v690 = vsub.f32 %v657, %v682
    %v691 = vmul.f32 %v683, 1.442695
    %v692 = vpow.pop %v691
    %v693 = vmul.f32 %v684, 1.442695
    %v694 = vpow.pop %v693
    %v695 = vmul.f32 %v685, 1.442695
    %v696 = vpow.pop %v695
    %v697 = vmul.f32 %v686, 1.442695
    %v698 = vpow.pop %v697
    %v699 = vmul.f32 %v687, 1.442695
    %v700 = vpow.pop %v699
    %v701 = vmul.f32 %v688, 1.442695
    %v702 = vpow.pop %v701
    %v703 = vmul.f32 %v689, 1.442695
    %v704 = vpow.pop %v703
    %v705 = vmul.f32 %v690, 1.442695
    %v706 = vpow.pop %v705
    %v707 = vsel %vm450, %v692, 0.0
    %708 = vadd.xlane.f32.xlu0 %v707
    %v709 = vpop.xlane.xlu0 %708
    %v710 = vsel %vm450, %v694, 0.0
    %711 = vadd.xlane.f32.xlu0 %v710
    %v712 = vpop.xlane.xlu0 %711
    %v713 = vsel %vm450, %v696, 0.0
    %714 = vadd.xlane.f32.xlu0 %v713
    %v715 = vpop.xlane.xlu0 %714
    %v716 = vsel %vm450, %v698, 0.0
    %717 = vadd.xlane.f32.xlu0 %v716
    %v718 = vpop.xlane.xlu0 %717
    %v719 = vsel %vm450, %v700, 0.0
    %720 = vadd.xlane.f32.xlu0 %v719
    %v721 = vpop.xlane.xlu0 %720
    %v722 = vsel %vm450, %v702, 0.0
    %723 = vadd.xlane.f32.xlu0 %v722
    %v724 = vpop.xlane.xlu0 %723
    %v725 = vsel %vm450, %v704, 0.0
    %726 = vadd.xlane.f32.xlu0 %v725
    %v727 = vpop.xlane.xlu0 %726
    %v728 = vsel %vm450, %v706, 0.0
    %729 = vadd.xlane.f32.xlu0 %v728
    %v730 = vpop.xlane.xlu0 %729
    %v731 = vrcp.pop %v709
    %v732 = vrcp.pop %v712
    %v733 = vrcp.pop %v715
    %v734 = vrcp.pop %v718
    %v735 = vrcp.pop %v721
    %v736 = vrcp.pop %v724
    %v737 = vrcp.pop %v727
    %v738 = vrcp.pop %v730
    %v739 = vmul.f32 %v692, %v731
    %v740 = vmul.f32 %v694, %v732
    %v741 = vmul.f32 %v696, %v733
    %v742 = vmul.f32 %v698, %v734
    %v743 = vmul.f32 %v700, %v735
    %v744 = vmul.f32 %v702, %v736
    %v745 = vmul.f32 %v704, %v737
    %v746 = vmul.f32 %v706, %v738
    %v747 = vld [vmem:[%s3] sm:$0xff]
    %v748 = vld [vmem:[%s3 + $0x8] sm:$0xff]
    %v749 = vld [vmem:[%s3 + $0x10] sm:$0xff]
    %v750 = vld [vmem:[%s3 + $0x18] sm:$0xff]
    %v751 = vld [vmem:[%s3 + $0x20] sm:$0xff]
    %v752 = vld [vmem:[%s3 + $0x28] sm:$0xff]
    %v753 = vld [vmem:[%s3 + $0x30] sm:$0xff]
    %v754 = vld [vmem:[%s3 + $0x38] sm:$0xff]
    %v755 = vld [vmem:[%s3 + $0x40] sm:$0xff]
    %v756 = vld [vmem:[%s3 + $0x48] sm:$0xff]
    %v757 = vld [vmem:[%s3 + $0x50] sm:$0xff]
    %v758 = vld [vmem:[%s3 + $0x58] sm:$0xff]
    %v759 = vld [vmem:[%s3 + $0x60] sm:$0xff]
    %v760 = vld [vmem:[%s3 + $0x68] sm:$0xff]
    %v761 = vld [vmem:[%s3 + $0x70] sm:$0xff]
    %v762 = vld [vmem:[%s3 + $0x78] sm:$0xff]
    %v763 = vld [vmem:[%s3 + $0x80] sm:$0xff]
    %v764 = vld [vmem:[%s3 + $0x88] sm:$0xff]
    %v765 = vld [vmem:[%s3 + $0x90] sm:$0xff]
    %v766 = vld [vmem:[%s3 + $0x98] sm:$0xff]
    %v767 = vld [vmem:[%s3 + $0xa0] sm:$0xff]
    %v768 = vld [vmem:[%s3 + $0xa8] sm:$0xff]
    %v769 = vld [vmem:[%s3 + $0xb0] sm:$0xff]
    %v770 = vld [vmem:[%s3 + $0xb8] sm:$0xff]
    %v771 = vld [vmem:[%s3 + $0xc0] sm:$0xff]
    %v772 = vld [vmem:[%s3 + $0xc8] sm:$0xff]
    %v773 = vld [vmem:[%s3 + $0xd0] sm:$0xff]
    %v774 = vld [vmem:[%s3 + $0xd8] sm:$0xff]
    %v775 = vld [vmem:[%s3 + $0xe0] sm:$0xff]
    %v776 = vld [vmem:[%s3 + $0xe8] sm:$0xff]
    %v777 = vld [vmem:[%s3 + $0xf0] sm:$0xff]
    %v778 = vld [vmem:[%s3 + $0xf8] sm:$0xff]
    %779 = vmatpush.msra.mxu0 0.0
    %780 = vmatpush.msra.mxu0 0.0
    %781 = vmatpush.msra.mxu0 0.0
    %782 = vmatpush.msra.mxu0 0.0
    %783 = vmatpush.msra.mxu0 0.0
    %784 = vmatpush.msra.mxu0 0.0
    %785 = vmatpush.msra.mxu0 0.0
    %786 = vmatpush.msra.mxu0 0.0
    %787 = vmatpush.msra.mxu0 0.0
    %788 = vmatpush.msra.mxu0 0.0
    %789 = vmatpush.msra.mxu0 0.0
    %790 = vmatpush.msra.mxu0 0.0
    %791 = vmatpush.msra.mxu0 %v750
    %792 = vmatpush.msra.mxu0 %v749
    %793 = vmatpush.msra.mxu0 %v748
    %794 = vmatpush.msra.mxu0 %v747
    %795 = vmatmul.f32.gmra.mxu0 %v92
    %v796 = vpop.f32.mrf.mxu0
    %v797 = vadd.f32 0.0, %v796
    %798 = vdwg.mxu0
    %799 = vmatpush.msra.mxu0 0.0
    %800 = vmatpush.msra.mxu0 0.0
    %801 = vmatpush.msra.mxu0 0.0
    %802 = vmatpush.msra.mxu0 0.0
    %803 = vmatpush.msra.mxu0 0.0
    %804 = vmatpush.msra.mxu0 0.0
    %805 = vmatpush.msra.mxu0 0.0
    %806 = vmatpush.msra.mxu0 0.0
    %807 = vmatpush.msra.mxu0 0.0
    %808 = vmatpush.msra.mxu0 0.0
    %809 = vmatpush.msra.mxu0 0.0
    %810 = vmatpush.msra.mxu0 0.0
    %811 = vmatpush.msra.mxu0 %v754
    %812 = vmatpush.msra.mxu0 %v753
    %813 = vmatpush.msra.mxu0 %v752
    %814 = vmatpush.msra.mxu0 %v751
    %815 = vmatmul.f32.gmra.mxu0 %v92
    %v816 = vpop.f32.mrf.mxu0
    %v817 = vadd.f32 0.0, %v816
    %818 = vdwg.mxu0
    %819 = vmatpush.msra.mxu0 0.0
    %820 = vmatpush.msra.mxu0 0.0
    %821 = vmatpush.msra.mxu0 0.0
    %822 = vmatpush.msra.mxu0 0.0
    %823 = vmatpush.msra.mxu0 0.0
    %824 = vmatpush.msra.mxu0 0.0
    %825 = vmatpush.msra.mxu0 0.0
    %826 = vmatpush.msra.mxu0 0.0
    %827 = vmatpush.msra.mxu0 0.0
    %828 = vmatpush.msra.mxu0 0.0
    %829 = vmatpush.msra.mxu0 0.0
    %830 = vmatpush.msra.mxu0 0.0
    %831 = vmatpush.msra.mxu0 %v758
    %832 = vmatpush.msra.mxu0 %v757
    %833 = vmatpush.msra.mxu0 %v756
    %834 = vmatpush.msra.mxu0 %v755
    %835 = vmatmul.f32.gmra.mxu0 %v92
    %v836 = vpop.f32.mrf.mxu0
    %v837 = vadd.f32 0.0, %v836
    %838 = vdwg.mxu0
    %839 = vmatpush.msra.mxu0 0.0
    %840 = vmatpush.msra.mxu0 0.0
    %841 = vmatpush.msra.mxu0 0.0
    %842 = vmatpush.msra.mxu0 0.0
    %843 = vmatpush.msra.mxu0 0.0
    %844 = vmatpush.msra.mxu0 0.0
    %845 = vmatpush.msra.mxu0 0.0
    %846 = vmatpush.msra.mxu0 0.0
    %847 = vmatpush.msra.mxu0 0.0
    %848 = vmatpush.msra.mxu0 0.0
    %849 = vmatpush.msra.mxu0 0.0
    %850 = vmatpush.msra.mxu0 0.0
    %851 = vmatpush.msra.mxu0 %v762
    %852 = vmatpush.msra.mxu0 %v761
    %853 = vmatpush.msra.mxu0 %v760
    %854 = vmatpush.msra.mxu0 %v759
    %855 = vmatmul.f32.gmra.mxu0 %v92
    %v856 = vpop.f32.mrf.mxu0
    %v857 = vadd.f32 0.0, %v856
    %858 = vdwg.mxu0
    %859 = vmatpush.msra.mxu0 0.0
    %860 = vmatpush.msra.mxu0 0.0
    %861 = vmatpush.msra.mxu0 0.0
    %862 = vmatpush.msra.mxu0 0.0
    %863 = vmatpush.msra.mxu0 0.0
    %864 = vmatpush.msra.mxu0 0.0
    %865 = vmatpush.msra.mxu0 0.0
    %866 = vmatpush.msra.mxu0 0.0
    %867 = vmatpush.msra.mxu0 0.0
    %868 = vmatpush.msra.mxu0 0.0
    %869 = vmatpush.msra.mxu0 0.0
    %870 = vmatpush.msra.mxu0 0.0
    %871 = vmatpush.msra.mxu0 %v766
    %872 = vmatpush.msra.mxu0 %v765
    %873 = vmatpush.msra.mxu0 %v764
    %874 = vmatpush.msra.mxu0 %v763
    %875 = vmatmul.f32.gmra.mxu0 %v175
    %v876 = vpop.f32.mrf.mxu0
    %v877 = vadd.f32 0.0, %v876
    %878 = vdwg.mxu0
    %879 = vmatpush.msra.mxu0 0.0
    %880 = vmatpush.msra.mxu0 0.0
    %881 = vmatpush.msra.mxu0 0.0
    %882 = vmatpush.msra.mxu0 0.0
    %883 = vmatpush.msra.mxu0 0.0
    %884 = vmatpush.msra.mxu0 0.0
    %885 = vmatpush.msra.mxu0 0.0
    %886 = vmatpush.msra.mxu0 0.0
    %887 = vmatpush.msra.mxu0 0.0
    %888 = vmatpush.msra.mxu0 0.0
    %889 = vmatpush.msra.mxu0 0.0
    %890 = vmatpush.msra.mxu0 0.0
    %891 = vmatpush.msra.mxu0 %v770
    %892 = vmatpush.msra.mxu0 %v769
    %893 = vmatpush.msra.mxu0 %v768
    %894 = vmatpush.msra.mxu0 %v767
    %895 = vmatmul.f32.gmra.mxu0 %v175
    %v896 = vpop.f32.mrf.mxu0
    %v897 = vadd.f32 0.0, %v896
    %898 = vdwg.mxu0
    %899 = vmatpush.msra.mxu0 0.0
    %900 = vmatpush.msra.mxu0 0.0
    %901 = vmatpush.msra.mxu0 0.0
    %902 = vmatpush.msra.mxu0 0.0
    %903 = vmatpush.msra.mxu0 0.0
    %904 = vmatpush.msra.mxu0 0.0
    %905 = vmatpush.msra.mxu0 0.0
    %906 = vmatpush.msra.mxu0 0.0
    %907 = vmatpush.msra.mxu0 0.0
    %908 = vmatpush.msra.mxu0 0.0
    %909 = vmatpush.msra.mxu0 0.0
    %910 = vmatpush.msra.mxu0 0.0
    %911 = vmatpush.msra.mxu0 %v774
    %912 = vmatpush.msra.mxu0 %v773
    %913 = vmatpush.msra.mxu0 %v772
    %914 = vmatpush.msra.mxu0 %v771
    %915 = vmatmul.f32.gmra.mxu0 %v175
    %v916 = vpop.f32.mrf.mxu0
    %v917 = vadd.f32 0.0, %v916
    %918 = vdwg.mxu0
    %919 = vmatpush.msra.mxu0 0.0
    %920 = vmatpush.msra.mxu0 0.0
    %921 = vmatpush.msra.mxu0 0.0
    %922 = vmatpush.msra.mxu0 0.0
    %923 = vmatpush.msra.mxu0 0.0
    %924 = vmatpush.msra.mxu0 0.0
    %925 = vmatpush.msra.mxu0 0.0
    %926 = vmatpush.msra.mxu0 0.0
    %927 = vmatpush.msra.mxu0 0.0
    %928 = vmatpush.msra.mxu0 0.0
    %929 = vmatpush.msra.mxu0 0.0
    %930 = vmatpush.msra.mxu0 0.0
    %931 = vmatpush.msra.mxu0 %v778
    %932 = vmatpush.msra.mxu0 %v777
    %933 = vmatpush.msra.mxu0 %v776
    %934 = vmatpush.msra.mxu0 %v775
    %935 = vmatmul.f32.gmra.mxu0 %v175
    %v936 = vpop.f32.mrf.mxu0
    %v937 = vadd.f32 0.0, %v936
    %938 = vdwg.mxu0
    %v940 = vsel %vm450, %v739, 0
    %942 = vmatpush.msra.mxu0 0.0
    %943 = vmatpush.msra.mxu0 0.0
    %944 = vmatpush.msra.mxu0 0.0
    %945 = vmatpush.msra.mxu0 0.0
    %946 = vmatpush.msra.mxu0 0.0
    %947 = vmatpush.msra.mxu0 0.0
    %948 = vmatpush.msra.mxu0 0.0
    %949 = vmatpush.msra.mxu0 0.0
    %950 = vmatpush.msra.mxu0 0.0
    %951 = vmatpush.msra.mxu0 0.0
    %952 = vmatpush.msra.mxu0 0.0
    %953 = vmatpush.msra.mxu0 0.0
    %954 = vmatpush.msra.mxu0 0.0
    %955 = vmatpush.msra.mxu0 0.0
    %956 = vmatpush.msra.mxu0 0.0
    %957 = vmatpush.msra.mxu0 %v797
    %958 = vmatmul.f32.gmra.mxu0 %v940
    %v959 = vpop.f32.mrf.mxu0
    %v960 = vadd.f32 0.0, %v959
    %961 = vdwg.mxu0
    %v963 = vsel %vm450, %v740, 0
    %965 = vmatpush.msra.mxu0 0.0
    %966 = vmatpush.msra.mxu0 0.0
    %967 = vmatpush.msra.mxu0 0.0
    %968 = vmatpush.msra.mxu0 0.0
    %969 = vmatpush.msra.mxu0 0.0
    %970 = vmatpush.msra.mxu0 0.0
    %971 = vmatpush.msra.mxu0 0.0
    %972 = vmatpush.msra.mxu0 0.0
    %973 = vmatpush.msra.mxu0 0.0
    %974 = vmatpush.msra.mxu0 0.0
    %975 = vmatpush.msra.mxu0 0.0
    %976 = vmatpush.msra.mxu0 0.0
    %977 = vmatpush.msra.mxu0 0.0
    %978 = vmatpush.msra.mxu0 0.0
    %979 = vmatpush.msra.mxu0 0.0
    %980 = vmatpush.msra.mxu0 %v817
    %981 = vmatmul.f32.gmra.mxu0 %v963
    %v982 = vpop.f32.mrf.mxu0
    %v983 = vadd.f32 0.0, %v982
    %984 = vdwg.mxu0
    %v986 = vsel %vm450, %v741, 0
    %988 = vmatpush.msra.mxu0 0.0
    %989 = vmatpush.msra.mxu0 0.0
    %990 = vmatpush.msra.mxu0 0.0
    %991 = vmatpush.msra.mxu0 0.0
    %992 = vmatpush.msra.mxu0 0.0
    %993 = vmatpush.msra.mxu0 0.0
    %994 = vmatpush.msra.mxu0 0.0
    %995 = vmatpush.msra.mxu0 0.0
    %996 = vmatpush.msra.mxu0 0.0
    %997 = vmatpush.msra.mxu0 0.0
    %998 = vmatpush.msra.mxu0 0.0
    %999 = vmatpush.msra.mxu0 0.0
    %1000 = vmatpush.msra.mxu0 0.0
    %1001 = vmatpush.msra.mxu0 0.0
    %1002 = vmatpush.msra.mxu0 0.0
    %1003 = vmatpush.msra.mxu0 %v837
    %1004 = vmatmul.f32.gmra.mxu0 %v986
    %v1005 = vpop.f32.mrf.mxu0
    %v1006 = vadd.f32 0.0, %v1005
    %1007 = vdwg.mxu0
    %v1009 = vsel %vm450, %v742, 0
    %1011 = vmatpush.msra.mxu0 0.0
    %1012 = vmatpush.msra.mxu0 0.0
    %1013 = vmatpush.msra.mxu0 0.0
    %1014 = vmatpush.msra.mxu0 0.0
    %1015 = vmatpush.msra.mxu0 0.0
    %1016 = vmatpush.msra.mxu0 0.0
    %1017 = vmatpush.msra.mxu0 0.0
    %1018 = vmatpush.msra.mxu0 0.0
    %1019 = vmatpush.msra.mxu0 0.0
    %1020 = vmatpush.msra.mxu0 0.0
    %1021 = vmatpush.msra.mxu0 0.0
    %1022 = vmatpush.msra.mxu0 0.0
    %1023 = vmatpush.msra.mxu0 0.0
    %1024 = vmatpush.msra.mxu0 0.0
    %1025 = vmatpush.msra.mxu0 0.0
    %1026 = vmatpush.msra.mxu0 %v857
    %1027 = vmatmul.f32.gmra.mxu0 %v1009
    %v1028 = vpop.f32.mrf.mxu0
    %v1029 = vadd.f32 0.0, %v1028
    %1030 = vdwg.mxu0
    %v1032 = vsel %vm450, %v743, 0
    %1034 = vmatpush.msra.mxu0 0.0
    %1035 = vmatpush.msra.mxu0 0.0
    %1036 = vmatpush.msra.mxu0 0.0
    %1037 = vmatpush.msra.mxu0 0.0
    %1038 = vmatpush.msra.mxu0 0.0
    %1039 = vmatpush.msra.mxu0 0.0
    %1040 = vmatpush.msra.mxu0 0.0
    %1041 = vmatpush.msra.mxu0 0.0
    %1042 = vmatpush.msra.mxu0 0.0
    %1043 = vmatpush.msra.mxu0 0.0
    %1044 = vmatpush.msra.mxu0 0.0
    %1045 = vmatpush.msra.mxu0 0.0
    %1046 = vmatpush.msra.mxu0 0.0
    %1047 = vmatpush.msra.mxu0 0.0
    %1048 = vmatpush.msra.mxu0 0.0
    %1049 = vmatpush.msra.mxu0 %v877
    %1050 = vmatmul.f32.gmra.mxu0 %v1032
    %v1051 = vpop.f32.mrf.mxu0
    %v1052 = vadd.f32 0.0, %v1051
    %1053 = vdwg.mxu0
    %v1055 = vsel %vm450, %v744, 0
    %1057 = vmatpush.msra.mxu0 0.0
    %1058 = vmatpush.msra.mxu0 0.0
    %1059 = vmatpush.msra.mxu0 0.0
    %1060 = vmatpush.msra.mxu0 0.0
    %1061 = vmatpush.msra.mxu0 0.0
    %1062 = vmatpush.msra.mxu0 0.0
    %1063 = vmatpush.msra.mxu0 0.0
    %1064 = vmatpush.msra.mxu0 0.0
    %1065 = vmatpush.msra.mxu0 0.0
    %1066 = vmatpush.msra.mxu0 0.0
    %1067 = vmatpush.msra.mxu0 0.0
    %1068 = vmatpush.msra.mxu0 0.0
    %1069 = vmatpush.msra.mxu0 0.0
    %1070 = vmatpush.msra.mxu0 0.0
    %1071 = vmatpush.msra.mxu0 0.0
    %1072 = vmatpush.msra.mxu0 %v897
    %1073 = vmatmul.f32.gmra.mxu0 %v1055
    %v1074 = vpop.f32.mrf.mxu0
    %v1075 = vadd.f32 0.0, %v1074
    %1076 = vdwg.mxu0
    %v1078 = vsel %vm450, %v745, 0
    %1080 = vmatpush.msra.mxu0 0.0
    %1081 = vmatpush.msra.mxu0 0.0
    %1082 = vmatpush.msra.mxu0 0.0
    %1083 = vmatpush.msra.mxu0 0.0
    %1084 = vmatpush.msra.mxu0 0.0
    %1085 = vmatpush.msra.mxu0 0.0
    %1086 = vmatpush.msra.mxu0 0.0
    %1087 = vmatpush.msra.mxu0 0.0
    %1088 = vmatpush.msra.mxu0 0.0
    %1089 = vmatpush.msra.mxu0 0.0
    %1090 = vmatpush.msra.mxu0 0.0
    %1091 = vmatpush.msra.mxu0 0.0
    %1092 = vmatpush.msra.mxu0 0.0
    %1093 = vmatpush.msra.mxu0 0.0
    %1094 = vmatpush.msra.mxu0 0.0
    %1095 = vmatpush.msra.mxu0 %v917
    %1096 = vmatmul.f32.gmra.mxu0 %v1078
    %v1097 = vpop.f32.mrf.mxu0
    %v1098 = vadd.f32 0.0, %v1097
    %1099 = vdwg.mxu0
    %v1101 = vsel %vm450, %v746, 0
    %1103 = vmatpush.msra.mxu0 0.0
    %1104 = vmatpush.msra.mxu0 0.0
    %1105 = vmatpush.msra.mxu0 0.0
    %1106 = vmatpush.msra.mxu0 0.0
    %1107 = vmatpush.msra.mxu0 0.0
    %1108 = vmatpush.msra.mxu0 0.0
    %1109 = vmatpush.msra.mxu0 0.0
    %1110 = vmatpush.msra.mxu0 0.0
    %1111 = vmatpush.msra.mxu0 0.0
    %1112 = vmatpush.msra.mxu0 0.0
    %1113 = vmatpush.msra.mxu0 0.0
    %1114 = vmatpush.msra.mxu0 0.0
    %1115 = vmatpush.msra.mxu0 0.0
    %1116 = vmatpush.msra.mxu0 0.0
    %1117 = vmatpush.msra.mxu0 0.0
    %1118 = vmatpush.msra.mxu0 %v937
    %1119 = vmatmul.f32.gmra.mxu0 %v1101
    %v1120 = vpop.f32.mrf.mxu0
    %v1121 = vadd.f32 0.0, %v1120
    %1122 = vdwg.mxu0
    %v1123 = vsel %vm90, %v960, 0.0
    %v1124 = vsel %vm90, %v983, 0.0
    %v1125 = vadd.f32 %v1123, %v1124
    %v1126 = vsel %vm90, %v1006, 0.0
    %v1127 = vadd.f32 %v1125, %v1126
    %v1128 = vsel %vm90, %v1029, 0.0
    %v1129 = vadd.f32 %v1127, %v1128
    %v1130 = vsel %vm90, %v1052, 0.0
    %v1131 = vsel %vm90, %v1075, 0.0
    %v1132 = vadd.f32 %v1130, %v1131
    %v1133 = vsel %vm90, %v1098, 0.0
    %v1134 = vadd.f32 %v1132, %v1133
    %v1135 = vsel %vm90, %v1121, 0.0
    %v1136 = vadd.f32 %v1134, %v1135
    %v1137 = vld [vmem:[%s5] sm:$0x1]
    %v1138 = vperm.slane %v1137, 0
    %v1139 = vadd.f32 %v1129, %v1138
    %v1140 = vadd.f32 %v1136, %v1138
    %v1141 = vadd.f32 %v24, %v1139
    %v1142 = vadd.f32 %v25, %v1140
    %v1143 = vld [vmem:[%s5 + $0x2] sm:$0x1]
    %v1144 = vld [vmem:[%s5 + $0x3] sm:$0x1]
    %v1145 = vsel %vm90, %v1141, 0.0
    %1146 = vadd.xlane.f32.xlu0 %v1145
    %v1147 = vpop.xlane.xlu0 %1146
    %v1148 = vsel %vm90, %v1142, 0.0
    %1149 = vadd.xlane.f32.xlu0 %v1148
    %v1150 = vpop.xlane.xlu0 %1149
    %v1151 = vrcp.pop 32.0
    %v1152 = vmul.f32 32.0, %v1151
    %v1153 = vsub.f32 1.0, %v1152
    %v1154 = vmul.f32 %v1151, %v1153
    %v1155 = vadd.f32 %v1151, %v1154
    %vm1156 = vweird.f32 %v1151
    %v1157 = vsel %vm1156, %v1151, %v1155
    %v1158 = vmul.f32 %v1147, %v1157
    %v1159 = vmul.f32 %v1150, %v1157
    %v1160 = vsub.f32 %v1141, %v1158
    %v1161 = vsub.f32 %v1142, %v1159
    %v1162 = vmul.f32 %v1160, %v1160
    %v1163 = vmul.f32 %v1161, %v1161
    %v1164 = vsel %vm90, %v1162, 0.0
    %1165 = vadd.xlane.f32.xlu0 %v1164
    %v1166 = vpop.xlane.xlu0 %1165
    %v1167 = vsel %vm90, %v1163, 0.0
    %1168 = vadd.xlane.f32.xlu0 %v1167
    %v1169 = vpop.xlane.xlu0 %1168
    %v1170 = vmul.f32 %v1166, %v1157
    %v1171 = vmul.f32 %v1169, %v1157
    %v1172 = vadd.f32 %v1170, 1e-05
    %v1173 = vadd.f32 %v1171, 1e-05
    %v1174 = vrsqrt.pop %v1172
    %v1175 = vmul.f32 %v1174, %v1172
    %v1176 = vmul.f32 %v1175, %v1174
    %v1177 = vmul.f32 0.5, %v1176
    %v1178 = vsub.f32 1.5, %v1177
    %v1179 = vmul.f32 %v1174, %v1178
    %vm1180 = vweird.f32 %v1172
    %vm1181 = vweird.f32 %v1174
    %vm1182 = vmor %vm1180, %vm1181
    %v1183 = vsel %vm1182, %v1174, %v1179
    %v1184 = vrsqrt.pop %v1173
    %v1185 = vmul.f32 %v1184, %v1173
    %v1186 = vmul.f32 %v1185, %v1184
    %v1187 = vmul.f32 0.5, %v1186
    %v1188 = vsub.f32 1.5, %v1187
    %v1189 = vmul.f32 %v1184, %v1188
    %vm1190 = vweird.f32 %v1173
    %vm1191 = vweird.f32 %v1184
    %vm1192 = vmor %vm1190, %vm1191
    %v1193 = vsel %vm1192, %v1184, %v1189
    %v1194 = vmul.f32 %v1160, %v1183
    %v1195 = vmul.f32 %v1161, %v1193
    %v1196 = vperm.slane %v1143, 0
    %v1197 = vmul.f32 %v1194, %v1196
    %v1198 = vmul.f32 %v1195, %v1196
    %v1199 = vperm.slane %v1144, 0
    %v1200 = vadd.f32 %v1197, %v1199
    %v1201 = vadd.f32 %v1198, %v1199
    %v1202 = vld [vmem:[%s4] sm:$0xff]
    %v1203 = vld [vmem:[%s4 + $0x8] sm:$0xff]
    %v1204 = vld [vmem:[%s4 + $0x10] sm:$0xff]
    %v1205 = vld [vmem:[%s4 + $0x18] sm:$0xff]
    %v1206 = vld [vmem:[%s5 + $0x1] sm:$0x1]
    %v1207 = vperm.slane %v1206, 0
    %v1209 = vsel %vm90, %v1200, 0
    %v1212 = vsel %vm90, %v1201, 0
    %1214 = vmatpush.msra.mxu0 0.0
    %1215 = vmatpush.msra.mxu0 0.0
    %1216 = vmatpush.msra.mxu0 0.0
    %1217 = vmatpush.msra.mxu0 0.0
    %1218 = vmatpush.msra.mxu0 0.0
    %1219 = vmatpush.msra.mxu0 0.0
    %1220 = vmatpush.msra.mxu0 0.0
    %1221 = vmatpush.msra.mxu0 0.0
    %1222 = vmatpush.msra.mxu0 0.0
    %1223 = vmatpush.msra.mxu0 0.0
    %1224 = vmatpush.msra.mxu0 0.0
    %1225 = vmatpush.msra.mxu0 0.0
    %1226 = vmatpush.msra.mxu0 %v1205
    %1227 = vmatpush.msra.mxu0 %v1204
    %1228 = vmatpush.msra.mxu0 %v1203
    %1229 = vmatpush.msra.mxu0 %v1202
    %1230 = vmatmul.f32.gmra.mxu0 %v1209
    %v1231 = vpop.f32.mrf.mxu0
    %v1232 = vadd.f32 %v1207, %v1231
    %1233 = vmatmul.f32.gmra.mxu0 %v1212
    %v1234 = vpop.f32.mrf.mxu0
    %v1235 = vadd.f32 %v1207, %v1234
    %1236 = vdwg.mxu0
    %v1237 = vmax.f32 %v1232, 0.0
    %v1238 = vmax.f32 %v1235, 0.0
    %v1239 = vadd.f32 %v1200, %v1237
    %v1240 = vadd.f32 %v1201, %v1238
    %v1241 = vld [vmem:[%s5 + $0x4] sm:$0x1]
    %v1242 = vld [vmem:[%s5 + $0x5] sm:$0x1]
    %v1243 = vsel %vm90, %v1239, 0.0
    %1244 = vadd.xlane.f32.xlu0 %v1243
    %v1245 = vpop.xlane.xlu0 %1244
    %v1246 = vsel %vm90, %v1240, 0.0
    %1247 = vadd.xlane.f32.xlu0 %v1246
    %v1248 = vpop.xlane.xlu0 %1247
    %v1249 = vmul.f32 %v1245, %v1157
    %v1250 = vmul.f32 %v1248, %v1157
    %v1251 = vsub.f32 %v1239, %v1249
    %v1252 = vsub.f32 %v1240, %v1250
    %v1253 = vmul.f32 %v1251, %v1251
    %v1254 = vmul.f32 %v1252, %v1252
    %v1255 = vsel %vm90, %v1253, 0.0
    %1256 = vadd.xlane.f32.xlu0 %v1255
    %v1257 = vpop.xlane.xlu0 %1256
    %v1258 = vsel %vm90, %v1254, 0.0
    %1259 = vadd.xlane.f32.xlu0 %v1258
    %v1260 = vpop.xlane.xlu0 %1259
    %v1261 = vmul.f32 %v1257, %v1157
    %v1262 = vmul.f32 %v1260, %v1157
    %v1263 = vadd.f32 %v1261, 1e-05
    %v1264 = vadd.f32 %v1262, 1e-05
    %v1265 = vrsqrt.pop %v1263
    %v1266 = vmul.f32 %v1265, %v1263
    %v1267 = vmul.f32 %v1266, %v1265
    %v1268 = vmul.f32 0.5, %v1267
    %v1269 = vsub.f32 1.5, %v1268
    %v1270 = vmul.f32 %v1265, %v1269
    %vm1271 = vweird.f32 %v1263
    %vm1272 = vweird.f32 %v1265
    %vm1273 = vmor %vm1271, %vm1272
    %v1274 = vsel %vm1273, %v1265, %v1270
    %v1275 = vrsqrt.pop %v1264
    %v1276 = vmul.f32 %v1275, %v1264
    %v1277 = vmul.f32 %v1276, %v1275
    %v1278 = vmul.f32 0.5, %v1277
    %v1279 = vsub.f32 1.5, %v1278
    %v1280 = vmul.f32 %v1275, %v1279
    %vm1281 = vweird.f32 %v1264
    %vm1282 = vweird.f32 %v1275
    %vm1283 = vmor %vm1281, %vm1282
    %v1284 = vsel %vm1283, %v1275, %v1280
    %v1285 = vmul.f32 %v1251, %v1274
    %v1286 = vmul.f32 %v1252, %v1284
    %v1287 = vperm.slane %v1241, 0
    %v1288 = vmul.f32 %v1285, %v1287
    %v1289 = vmul.f32 %v1286, %v1287
    %v1290 = vperm.slane %v1242, 0
    %v1291 = vadd.f32 %v1288, %v1290
    %v1292 = vadd.f32 %v1289, %v1290
    %1293 = vst.msk [vmem:[#allocation2] sm:$0xff] %vm90, %v1291
    %1294 = vst.msk [vmem:[#allocation2 + $0x8] sm:$0xff] %vm90, %v1292
    // Predicated region
    $region26: #{sab_forward.1} parent=1 // pred_check
      _
    $region27: #{sab_forward.1} parent=1 // pred_check_branch
      %1296 = sbr.rel (0) target = $region29
    $region28: #{sab_forward.1} parent=1 // pred_region
      %1298 = vsyncadd [#allocation3], 0
      %s1299 = sshll.u32 [#allocation2], 4
      %s1300 = int_to_ptr.vmem [resolvable:$true] %s1299
      %s1301 = sshll.u32 %s6, 4
      %s1302 = int_to_ptr.hbm [resolvable:$true] %s1301
      %1307 = dma.vmem_to_hbm [thread:$0]  %s1300, 256, %s1302, [#allocation3], 128, 128, 8
    $region29: #{sab_forward.1} parent=1 // pred_fallthru
      _
    // Predicated region
    $region30: #{sab_forward.1} parent=1 // pred_check
      _
    $region31: #{sab_forward.1} parent=1 // pred_check_branch
      %1309 = sbr.rel (0) target = $region33
    $region32: #{sab_forward.1} parent=1 // pred_region
      %1311 = dma.done [#allocation3], 256
    $region33: #{sab_forward.1} parent=1 // pred_fallthru
      _
    %1312 = vsyncpa [#allocation3], 1

</llo_original>
